<compile_context>
chip_gen: v6e
topology: v6e:2x2x1
jax: 0.10.0
libtpu: 0.0.40
codegen_flags: <defaults>
</compile_context>

<pallas_src>
import jax
import jax.numpy as jnp
from jax.experimental import pallas as pl
from jax.experimental.pallas import tpu as pltpu

OBS_DIM = 14
ACT_DIM = 2
HIDDEN = 512
MAX_TILE_B = 1024  # fat batch tile: amortizes per-grid-step overhead; ~2.2 MiB live VMEM


def _round_up(x, m):
    return ((x + m - 1) // m) * m


def critic_kernel(x_ref, w1_ref, b1_ref, weff_ref, beff_ref, out_ref):
    # x: [TB, D] f32 (streams over the batch grid); weights are VMEM-resident.
    # fc1 on the MXU with f32 accumulation (K = obs+act = 16; MXU has huge slack).
    h1 = jnp.dot(x_ref[...], w1_ref[...], preferred_element_type=jnp.float32)
    h1 = jnp.maximum(h1 + b1_ref[...], 0.0)                  # bias + ReLU on the VPU
    # Folded fc2∘fc3 (no activation between them in the module): per-row dot with the
    # effective [1, H] row -> VPU multiply + cross-lane (XLU) reduce.
    q = jnp.sum(h1 * weff_ref[...], axis=-1)                 # [TB]
    # Lane-dense store: write a [1, TB] row (unmasked vst) instead of a [TB, 1] column.
    out_ref[...] = jnp.tanh(q + beff_ref[0, 0])[None, :]


def critic_forward(s, a, kernel_params, *, max_tile_b=MAX_TILE_B):
    """s: [B, obs_dim] f32, a: [B, act_dim] f32 -> [B, 1] f32."""
    w1, b1, w_eff, b_eff = kernel_params
    B = s.shape[0]
    D = s.shape[1] + a.shape[1]
    H = w1.shape[1]

    # --- batch tile selection ---
    #  * tiny B (<=128): one 128-row tile (don't waste cycles on padded rows)
    #  * medium B (fits one tile): split into 2 tiles so the "parallel" batch axis
    #    feeds both v7x TensorCores (one extra ~0.35 us step is noise on v5e/v6e)
    #  * large B: 1024-row tiles to amortize per-grid-step overhead
    tile_b = min(max_tile_b, _round_up(B, 128))
    if 128 < B <= tile_b:
        tile_b = _round_up((B + 1) // 2, 128)
    Bp = _round_up(B, tile_b)
    nb = Bp // tile_b

    # Build x exactly once (concat [+ pad] fuse into a single XLA producer).
    x = jnp.concatenate([s, a], axis=-1).astype(jnp.float32)
    if Bp != B:
        x = jnp.pad(x, ((0, Bp - B), (0, 0)))

    out = pl.pallas_call(
        critic_kernel,
        out_shape=jax.ShapeDtypeStruct((1, Bp), jnp.float32),
        grid=(nb,),
        in_specs=[
            # Activations stream + double-buffer over the batch grid.
            pl.BlockSpec((tile_b, D), lambda i: (i, 0)),
            # Weights / biases: constant block index -> VMEM-resident across all steps.
            pl.BlockSpec((D, H), lambda i: (0, 0)),          # w1  (f32, ~32 KiB)
            pl.BlockSpec((1, H), lambda i: (0, 0)),          # b1
            pl.BlockSpec((1, H), lambda i: (0, 0)),          # w_eff (folded fc2∘fc3 row)
            pl.BlockSpec(memory_space=pltpu.SMEM),           # b_eff scalar [1,1]
        ],
        # Lane-dense output: [1, Bp] with [1, tile_b] blocks.
        out_specs=pl.BlockSpec((1, tile_b), lambda i: (0, i)),
        compiler_params=pltpu.CompilerParams(
            dimension_semantics=("parallel",),               # megacore-shardable batch axis
        ),
    )(x, w1, b1, w_eff, b_eff)
    return out[0, :B].reshape(B, 1)


def init_params(key, obs_dim=OBS_DIM, act_dim=ACT_DIM, hidden_size=HIDDEN):
    """f32 master params mimicking nn.Linear's U(-1/sqrt(fan_in), 1/sqrt(fan_in)).

    Layout: weights [in_features, out_features] (transposed vs. PyTorch), biases
    [1, out].  fc3's weight is kept as a [1, hidden] row, its bias as [1, 1]."""
    in_dim = obs_dim + act_dim
    k1, k2, k3, k4, k5, k6 = jax.random.split(key, 6)

    def lin(kw, kb, fan_in, fan_out):
        bound = 1.0 / jnp.sqrt(jnp.float32(fan_in))
        w = jax.random.uniform(kw, (fan_in, fan_out), jnp.float32, -bound, bound)
        b = jax.random.uniform(kb, (1, fan_out), jnp.float32, -bound, bound)
        return w, b

    w1, b1 = lin(k1, k2, in_dim, hidden_size)
    w2, b2 = lin(k3, k4, hidden_size, hidden_size)
    w3, b3 = lin(k5, k6, hidden_size, 1)
    return (w1, b1, w2, b2, w3.reshape(1, hidden_size), b3.reshape(1, 1))


def to_kernel_params(params):
    """Fold fc2∘fc3 (valid because the module applies no activation between them):
         (h1 @ W2 + b2) @ w3 + b3 == h1 @ (W2 @ w3) + (b2 @ w3 + b3)
    so the kernel only needs w_eff [1, H] and b_eff [1, 1]."""
    w1, b1, w2, b2, w3_row, b3 = params
    w_eff = (w2 @ w3_row.T).T                      # [1, H]  (f32 fold, one-time cost)
    b_eff = (b2 @ w3_row.T) + b3                   # [1, 1]
    return (w1, b1, w_eff, b_eff)


def critic_reference_f32(s, a, params):
    """Pure-JAX f32 reference matching the original PyTorch module's math (unfolded)."""
    w1, b1, w2, b2, w3_row, b3 = params
    x = jnp.concatenate([s, a], axis=-1).astype(jnp.float32)
    h1 = jnp.maximum(x @ w1 + b1, 0.0)
    h2 = h1 @ w2 + b2                               # no activation after fc2 (per module)
    return jnp.tanh(h2 @ w3_row.T + b3)


if __name__ == "__main__":
    obs_dim, act_dim, hidden_size = OBS_DIM, ACT_DIM, HIDDEN

    key = jax.random.PRNGKey(0)
    kp, ks, ka = jax.random.split(key, 3)
    params = init_params(kp, obs_dim, act_dim, hidden_size)
    kparams = to_kernel_params(params)

    # Small batch: single 128-row tile (latency path).
    B0 = 8
    s = jax.random.normal(ks, (B0, obs_dim), jnp.float32)
    a = jax.random.normal(ka, (B0, act_dim), jnp.float32)
    out = jax.block_until_ready(critic_forward(s, a, kparams))
    assert out.shape == (B0, 1), out.shape
    ref = critic_reference_f32(s, a, params)
    err = float(jnp.max(jnp.abs(out - ref)))
    assert jnp.allclose(out, ref, atol=1e-3, rtol=1e-3), err

    # Odd medium batch: exercises padding + the >=2-grid-step (v7x two-TC) path.
    B1 = 300
    s1 = jax.random.normal(jax.random.fold_in(ks, 1), (B1, obs_dim), jnp.float32)
    a1 = jax.random.normal(jax.random.fold_in(ka, 1), (B1, act_dim), jnp.float32)
    out1 = jax.block_until_ready(critic_forward(s1, a1, kparams))
    assert out1.shape == (B1, 1), out1.shape
    ref1 = critic_reference_f32(s1, a1, params)
    err1 = float(jnp.max(jnp.abs(out1 - ref1)))
    assert jnp.allclose(out1, ref1, atol=1e-3, rtol=1e-3), err1

    print("KERNEL_OK")
</pallas_src>

<mosaic_0001>
module attributes {stable_mosaic.version = 11 : i64} {
  func.func @critic_kernel(%arg0: i32, %arg1: memref<128x16xf32, #tpu.memory_space<vmem>>, %arg2: memref<16x512xf32, #tpu.memory_space<vmem>>, %arg3: memref<1x512xf32, #tpu.memory_space<vmem>>, %arg4: memref<1x512xf32, #tpu.memory_space<vmem>>, %arg5: memref<1x1xf32, #tpu.memory_space<smem>>, %arg6: memref<1x128xf32, #tpu.memory_space<vmem>>) attributes {dimension_semantics = [#tpu.dimension_semantics<parallel>], iteration_bounds = array<i64: 1>, scalar_prefetch = 0 : i64, scratch_operands = 0 : i64, tpu.core_type = #tpu.core_type<tc>, window_params = [{transform_indices = @transform_0, window_bounds = array<i64: 128, 16>}, {pipeline_mode = #tpu.pipeline_mode<synchronous>, transform_indices = @transform_1, window_bounds = array<i64: 16, 512>}, {pipeline_mode = #tpu.pipeline_mode<synchronous>, transform_indices = @transform_2, window_bounds = array<i64: 1, 512>}, {pipeline_mode = #tpu.pipeline_mode<synchronous>, transform_indices = @transform_3, window_bounds = array<i64: 1, 512>}, {transform_indices = @transform_4, window_bounds = array<i64: 1, 1>}, {transform_indices = @transform_5, window_bounds = array<i64: 1, 128>}]} {
    %c0 = arith.constant 0 : index
    %c0_0 = arith.constant 0 : index
    %0 = vector.load %arg1[%c0, %c0_0] : memref<128x16xf32, #tpu.memory_space<vmem>>, vector<128x16xf32>
    %c0_1 = arith.constant 0 : index
    %c0_2 = arith.constant 0 : index
    %1 = vector.load %arg2[%c0_1, %c0_2] : memref<16x512xf32, #tpu.memory_space<vmem>>, vector<16x512xf32>
    %cst = arith.constant dense<0.000000e+00> : vector<128x512xf32>
    %2 = tpu.matmul %0, %1, %cst {dimension_numbers = #tpu.dot_dimension_numbers<[1], [0], [0], [1], [0, 0, 1, 1], [], []>} : vector<128x16xf32>, vector<16x512xf32>, vector<128x512xf32> -> vector<128x512xf32>
    %c0_3 = arith.constant 0 : index
    %c0_4 = arith.constant 0 : index
    %3 = vector.load %arg3[%c0_3, %c0_4] : memref<1x512xf32, #tpu.memory_space<vmem>>, vector<1x512xf32>
    %4 = vector.broadcast %3 : vector<1x512xf32> to vector<128x512xf32>
    %5 = arith.addf %2, %4 : vector<128x512xf32>
    %cst_5 = arith.constant 0.000000e+00 : f32
    %6 = vector.broadcast %cst_5 : f32 to vector<128x512xf32>
    %7 = arith.maximumf %5, %6 : vector<128x512xf32>
    %c0_6 = arith.constant 0 : index
    %c0_7 = arith.constant 0 : index
    %8 = vector.load %arg4[%c0_6, %c0_7] : memref<1x512xf32, #tpu.memory_space<vmem>>, vector<1x512xf32>
    %9 = vector.broadcast %8 : vector<1x512xf32> to vector<128x512xf32>
    %10 = arith.mulf %7, %9 : vector<128x512xf32>
    %cst_8 = arith.constant dense<0.000000e+00> : vector<128xf32>
    %11 = vector.multi_reduction <add>, %10, %cst_8 [1] : vector<128x512xf32> to vector<128xf32>
    %c0_9 = arith.constant 0 : index
    %c0_10 = arith.constant 0 : index
    %12 = memref.load %arg5[%c0_9, %c0_10] : memref<1x1xf32, #tpu.memory_space<smem>>
    %13 = vector.broadcast %12 : f32 to vector<128xf32>
    %14 = arith.addf %11, %13 : vector<128xf32>
    %15 = math.tanh %14 : vector<128xf32>
    %16 = vector.shape_cast %15 : vector<128xf32> to vector<1x128xf32>
    %c0_11 = arith.constant 0 : index
    %c0_12 = arith.constant 0 : index
    %17 = vector.load %arg6[%c0_11, %c0_12] : memref<1x128xf32, #tpu.memory_space<vmem>>, vector<1x128xf32>
    tpu.vector_store %arg6[%c0_11, %c0_12], %16 {strides = array<i32>} : memref<1x128xf32, #tpu.memory_space<vmem>>, vector<1x128xf32>,
    return
  }
  func.func @transform_0(%arg0: i32) -> (i32, i32) {
    %c0_i32 = arith.constant 0 : i32
    %c0_i32_0 = arith.constant 0 : i32
    return %arg0, %c0_i32 : i32, i32
  }
  func.func @transform_1(%arg0: i32) -> (i32, i32) {
    %c0_i32 = arith.constant 0 : i32
    %c0_i32_0 = arith.constant 0 : i32
    %c0_i32_1 = arith.constant 0 : i32
    return %c0_i32, %c0_i32_0 : i32, i32
  }
  func.func @transform_2(%arg0: i32) -> (i32, i32) {
    %c0_i32 = arith.constant 0 : i32
    %c0_i32_0 = arith.constant 0 : i32
    %c0_i32_1 = arith.constant 0 : i32
    return %c0_i32, %c0_i32_0 : i32, i32
  }
  func.func @transform_3(%arg0: i32) -> (i32, i32) {
    %c0_i32 = arith.constant 0 : i32
    %c0_i32_0 = arith.constant 0 : i32
    %c0_i32_1 = arith.constant 0 : i32
    return %c0_i32, %c0_i32_0 : i32, i32
  }
  func.func @transform_4(%arg0: i32) -> (i32, i32) {
    %c0_i32 = arith.constant 0 : i32
    %c0_i32_0 = arith.constant 0 : i32
    %c0_i32_1 = arith.constant 0 : i32
    return %c0_i32, %c0_i32_0 : i32, i32
  }
  func.func @transform_5(%arg0: i32) -> (i32, i32) {
    %c0_i32 = arith.constant 0 : i32
    %c0_i32_0 = arith.constant 0 : i32
    return %c0_i32, %arg0 : i32, i32
  }
}

</mosaic_0001>

<llo_original>
// kernel: tpu_custom_call.1
$region0: #{tpu_custom_call.1}
  #allocation0 [shape = 'u32[]', space=smem, size = 0x4, offset = 0x4, fixed_abs, tag = 'smem constant byte address 0x4 - core index']
  #allocation1 [shape = 'u32[144,128]{1,0:T(1,128)}', space=vmem, size = 0x12000, scoped, tag = 'internal scratch']
  #allocation2 [shape = 'f32[1,1]{1,0:T(1,128)S(6)}', space=smem, size = 0x200, scoped, tag = 'scoped memory for tpu_custom_call.1']
  %s0 = inlined_call_operand.vmem [shape: f32[128,16], index: 0, kind: input, shape index: {}]
  %s1 = inlined_call_operand.vmem [shape: f32[16,512], index: 1, kind: input, shape index: {}]
  %s2 = inlined_call_operand.vmem [shape: f32[1,512], index: 2, kind: input, shape index: {}]
  %s3 = inlined_call_operand.vmem [shape: f32[1,512], index: 3, kind: input, shape index: {}]
  %s4 = inlined_call_operand.<no memory space> [shape: f32[1,1], index: 4, kind: input, shape index: {}]
  %s5 = inlined_call_operand.hbm [shape: f32[1,128], index: 5, kind: output, shape index: {}]
  %s6 = sld [smem:[#allocation0]]
  $region30: #{tpu_custom_call.1} parent=0
    _
  %s8 = ssub.s32 1, %s6
  %s9 = scalar_select 0, %s8, %s6
  %10 = sst [smem:[#allocation2]] %s4
  $region1: #{tpu_custom_call.1} parent=0
    #allocation3 [shape = 'u8[512]{0}', space=vmem, size = 0x400, scoped, tag = 'output window, operand 0, single buffered']
    #allocation4 [shape = 's32[1]{0}', space=sflag, size = 0x4, scoped, tag = 'scoped memory for tpu_custom_call.1']
    %11 = vsyncpa [#allocation4], 0
    // Predicated region
    $region2: #{tpu_custom_call.1} parent=1 // pred_check
      _
    $region3: #{tpu_custom_call.1} parent=1 // pred_check_branch
      %13 = sbr.rel (0) target = $region5
    $region4: #{tpu_custom_call.1} parent=1 // pred_region
      _
    $region5: #{tpu_custom_call.1} parent=1 // pred_fallthru
      _
    // Predicated region
    $region6: #{tpu_custom_call.1} parent=1 // pred_check
      _
    $region7: #{tpu_custom_call.1} parent=1 // pred_check_branch
      %15 = sbr.rel (0) target = $region9
    $region8: #{tpu_custom_call.1} parent=1 // pred_region
      _
    $region9: #{tpu_custom_call.1} parent=1 // pred_fallthru
      _
    // Predicated region
    $region10: #{tpu_custom_call.1} parent=1 // pred_check
      _
    $region11: #{tpu_custom_call.1} parent=1 // pred_check_branch
      %17 = sbr.rel (0) target = $region13
    $region12: #{tpu_custom_call.1} parent=1 // pred_region
      _
    $region13: #{tpu_custom_call.1} parent=1 // pred_fallthru
      _
    // Predicated region
    $region14: #{tpu_custom_call.1} parent=1 // pred_check
      _
    $region15: #{tpu_custom_call.1} parent=1 // pred_check_branch
      %19 = sbr.rel (0) target = $region17
    $region16: #{tpu_custom_call.1} parent=1 // pred_region
      _
    $region17: #{tpu_custom_call.1} parent=1 // pred_fallthru
      _
    // Predicated region
    $region18: #{tpu_custom_call.1} parent=1 // pred_check
      _
    $region19: #{tpu_custom_call.1} parent=1 // pred_check_branch
      %21 = sbr.rel (0) target = $region21
    $region20: #{tpu_custom_call.1} parent=1 // pred_region
      _
    $region21: #{tpu_custom_call.1} parent=1 // pred_fallthru
      _
    %v22 = vld [vmem:[%s0] sm:$0xff]
    %v23 = vld [vmem:[%s0 + $0x8] sm:$0xff]
    %v24 = vld [vmem:[%s0 + $0x10] sm:$0xff]
    %v25 = vld [vmem:[%s0 + $0x18] sm:$0xff]
    %v26 = vld [vmem:[%s0 + $0x20] sm:$0xff]
    %v27 = vld [vmem:[%s0 + $0x28] sm:$0xff]
    %v28 = vld [vmem:[%s0 + $0x30] sm:$0xff]
    %v29 = vld [vmem:[%s0 + $0x38] sm:$0xff]
    %v30 = vld [vmem:[%s0 + $0x40] sm:$0xff]
    %v31 = vld [vmem:[%s0 + $0x48] sm:$0xff]
    %v32 = vld [vmem:[%s0 + $0x50] sm:$0xff]
    %v33 = vld [vmem:[%s0 + $0x58] sm:$0xff]
    %v34 = vld [vmem:[%s0 + $0x60] sm:$0xff]
    %v35 = vld [vmem:[%s0 + $0x68] sm:$0xff]
    %v36 = vld [vmem:[%s0 + $0x70] sm:$0xff]
    %v37 = vld [vmem:[%s0 + $0x78] sm:$0xff]
    %v38 = vld [vmem:[%s1] sm:$0xff]
    %v39 = vld [vmem:[%s1 + $0x8] sm:$0xff]
    %v40 = vld [vmem:[%s1 + $0x10] sm:$0xff]
    %v41 = vld [vmem:[%s1 + $0x18] sm:$0xff]
    %v42 = vld [vmem:[%s1 + $0x20] sm:$0xff]
    %v43 = vld [vmem:[%s1 + $0x28] sm:$0xff]
    %v44 = vld [vmem:[%s1 + $0x30] sm:$0xff]
    %v45 = vld [vmem:[%s1 + $0x38] sm:$0xff]
    %v46 = vld [vmem:[%s2] sm:$0xf]
    %v48 = vlaneseq
    %v49 = vshrl.u32 %v48, 7
    %v50 = vsub.s32 0, %v49
    %v51 = vrot.slane %v46, %v50
    %v52 = vlaneseq
    %v53 = vshrl.u32 %v52, 7
    %v54 = vsub.s32 1, %v53
    %v55 = vrot.slane %v46, %v54
    %v56 = vlaneseq
    %v57 = vshrl.u32 %v56, 7
    %v58 = vsub.s32 2, %v57
    %v59 = vrot.slane %v46, %v58
    %v60 = vlaneseq
    %v61 = vshrl.u32 %v60, 7
    %v62 = vsub.s32 3, %v61
    %v63 = vrot.slane %v46, %v62
    %vm68 = vcmask 130048
    %v70 = vsel %vm68, %v22, 0
    %v73 = vsel %vm68, %v23, 0
    %v76 = vsel %vm68, %v24, 0
    %v79 = vsel %vm68, %v25, 0
    %v82 = vsel %vm68, %v26, 0
    %v85 = vsel %vm68, %v27, 0
    %v88 = vsel %vm68, %v28, 0
    %v91 = vsel %vm68, %v29, 0
    %v94 = vsel %vm68, %v30, 0
    %v97 = vsel %vm68, %v31, 0
    %v100 = vsel %vm68, %v32, 0
    %v103 = vsel %vm68, %v33, 0
    %v106 = vsel %vm68, %v34, 0
    %v109 = vsel %vm68, %v35, 0
    %v112 = vsel %vm68, %v36, 0
    %v115 = vsel %vm68, %v37, 0
    %117 = vmatprep.subr.mxu0 0.0
    %118 = vmatpush1.msra.mxu0 0.0
    %119 = vmatprep.subr.mxu0 0.0
    %120 = vmatpush1.msra.mxu0 0.0
    %121 = vmatprep.subr.mxu0 0.0
    %122 = vmatpush1.msra.mxu0 0.0
    %123 = vmatprep.subr.mxu0 0.0
    %124 = vmatpush1.msra.mxu0 0.0
    %125 = vmatprep.subr.mxu0 0.0
    %126 = vmatpush1.msra.mxu0 0.0
    %127 = vmatprep.subr.mxu0 0.0
    %128 = vmatpush1.msra.mxu0 0.0
    %129 = vmatprep.subr.mxu0 0.0
    %130 = vmatpush1.msra.mxu0 0.0
    %131 = vmatprep.subr.mxu0 0.0
    %132 = vmatpush1.msra.mxu0 0.0
    %133 = vmatprep.subr.mxu0 0.0
    %134 = vmatpush1.msra.mxu0 0.0
    %135 = vmatprep.subr.mxu0 0.0
    %136 = vmatpush1.msra.mxu0 0.0
    %137 = vmatprep.subr.mxu0 0.0
    %138 = vmatpush1.msra.mxu0 0.0
    %139 = vmatprep.subr.mxu0 0.0
    %140 = vmatpush1.msra.mxu0 0.0
    %141 = vmatprep.subr.mxu0 0.0
    %142 = vmatpush1.msra.mxu0 0.0
    %143 = vmatprep.subr.mxu0 0.0
    %144 = vmatpush1.msra.mxu0 0.0
    %145 = vmatprep.subr.mxu0 %v43
    %146 = vmatpush1.msra.mxu0 %v42
    %147 = vmatprep.subr.mxu0 %v39
    %148 = vmatpush1.msra.mxu0 %v38
    %149 = vmatprep.subr.mxu0 0.0
    %150 = vmatpush2.msra.mxu0 0.0
    %151 = vmatprep.subr.mxu0 0.0
    %152 = vmatpush2.msra.mxu0 0.0
    %153 = vmatprep.subr.mxu0 0.0
    %154 = vmatpush2.msra.mxu0 0.0
    %155 = vmatprep.subr.mxu0 0.0
    %156 = vmatpush2.msra.mxu0 0.0
    %157 = vmatprep.subr.mxu0 0.0
    %158 = vmatpush2.msra.mxu0 0.0
    %159 = vmatprep.subr.mxu0 0.0
    %160 = vmatpush2.msra.mxu0 0.0
    %161 = vmatprep.subr.mxu0 0.0
    %162 = vmatpush2.msra.mxu0 0.0
    %163 = vmatprep.subr.mxu0 0.0
    %164 = vmatpush2.msra.mxu0 0.0
    %165 = vmatprep.subr.mxu0 0.0
    %166 = vmatpush2.msra.mxu0 0.0
    %167 = vmatprep.subr.mxu0 0.0
    %168 = vmatpush2.msra.mxu0 0.0
    %169 = vmatprep.subr.mxu0 0.0
    %170 = vmatpush2.msra.mxu0 0.0
    %171 = vmatprep.subr.mxu0 0.0
    %172 = vmatpush2.msra.mxu0 0.0
    %173 = vmatprep.subr.mxu0 0.0
    %174 = vmatpush2.msra.mxu0 0.0
    %175 = vmatprep.subr.mxu0 0.0
    %176 = vmatpush2.msra.mxu0 0.0
    %177 = vmatprep.subr.mxu0 0.0
    %178 = vmatpush2.msra.mxu0 0.0
    %179 = vmatprep.subr.mxu0 0.0
    %180 = vmatpush2.msra.mxu0 0.0
    %181 = vmatprep.mubr.f32.mxu0 0.0
    %182 = vmatmul.mubr.f32.gmra.mxu0 %v70
    %v183 = vpop.f32.mrf.mxu0
    %v184 = vadd.f32 %v51, %v183
    %v185 = vpop.f32.mrf.mxu0
    %v186 = vadd.f32 %v55, %v185
    %187 = vmatprep.mubr.f32.mxu0 0.0
    %188 = vmatmul.mubr.f32.gmra.mxu0 %v73
    %v189 = vpop.f32.mrf.mxu0
    %v190 = vadd.f32 %v51, %v189
    %v191 = vpop.f32.mrf.mxu0
    %v192 = vadd.f32 %v55, %v191
    %193 = vmatprep.mubr.f32.mxu0 0.0
    %194 = vmatmul.mubr.f32.gmra.mxu0 %v76
    %v195 = vpop.f32.mrf.mxu0
    %v196 = vadd.f32 %v51, %v195
    %v197 = vpop.f32.mrf.mxu0
    %v198 = vadd.f32 %v55, %v197
    %199 = vmatprep.mubr.f32.mxu0 0.0
    %200 = vmatmul.mubr.f32.gmra.mxu0 %v79
    %v201 = vpop.f32.mrf.mxu0
    %v202 = vadd.f32 %v51, %v201
    %v203 = vpop.f32.mrf.mxu0
    %v204 = vadd.f32 %v55, %v203
    %205 = vmatprep.mubr.f32.mxu0 0.0
    %206 = vmatmul.mubr.f32.gmra.mxu0 %v82
    %v207 = vpop.f32.mrf.mxu0
    %v208 = vadd.f32 %v51, %v207
    %v209 = vpop.f32.mrf.mxu0
    %v210 = vadd.f32 %v55, %v209
    %211 = vmatprep.mubr.f32.mxu0 0.0
    %212 = vmatmul.mubr.f32.gmra.mxu0 %v85
    %v213 = vpop.f32.mrf.mxu0
    %v214 = vadd.f32 %v51, %v213
    %v215 = vpop.f32.mrf.mxu0
    %v216 = vadd.f32 %v55, %v215
    %217 = vmatprep.mubr.f32.mxu0 0.0
    %218 = vmatmul.mubr.f32.gmra.mxu0 %v88
    %v219 = vpop.f32.mrf.mxu0
    %v220 = vadd.f32 %v51, %v219
    %v221 = vpop.f32.mrf.mxu0
    %v222 = vadd.f32 %v55, %v221
    %223 = vmatprep.mubr.f32.mxu0 0.0
    %224 = vmatmul.mubr.f32.gmra.mxu0 %v91
    %v225 = vpop.f32.mrf.mxu0
    %v226 = vadd.f32 %v51, %v225
    %v227 = vpop.f32.mrf.mxu0
    %v228 = vadd.f32 %v55, %v227
    %229 = vmatprep.mubr.f32.mxu0 0.0
    %230 = vmatmul.mubr.f32.gmra.mxu0 %v94
    %v231 = vpop.f32.mrf.mxu0
    %v232 = vadd.f32 %v51, %v231
    %v233 = vpop.f32.mrf.mxu0
    %v234 = vadd.f32 %v55, %v233
    %235 = vmatprep.mubr.f32.mxu0 0.0
    %236 = vmatmul.mubr.f32.gmra.mxu0 %v97
    %v237 = vpop.f32.mrf.mxu0
    %v238 = vadd.f32 %v51, %v237
    %v239 = vpop.f32.mrf.mxu0
    %v240 = vadd.f32 %v55, %v239
    %241 = vmatprep.mubr.f32.mxu0 0.0
    %242 = vmatmul.mubr.f32.gmra.mxu0 %v100
    %v243 = vpop.f32.mrf.mxu0
    %v244 = vadd.f32 %v51, %v243
    %v245 = vpop.f32.mrf.mxu0
    %v246 = vadd.f32 %v55, %v245
    %247 = vmatprep.mubr.f32.mxu0 0.0
    %248 = vmatmul.mubr.f32.gmra.mxu0 %v103
    %v249 = vpop.f32.mrf.mxu0
    %v250 = vadd.f32 %v51, %v249
    %v251 = vpop.f32.mrf.mxu0
    %v252 = vadd.f32 %v55, %v251
    %253 = vmatprep.mubr.f32.mxu0 0.0
    %254 = vmatmul.mubr.f32.gmra.mxu0 %v106
    %v255 = vpop.f32.mrf.mxu0
    %v256 = vadd.f32 %v51, %v255
    %v257 = vpop.f32.mrf.mxu0
    %v258 = vadd.f32 %v55, %v257
    %259 = vmatprep.mubr.f32.mxu0 0.0
    %260 = vmatmul.mubr.f32.gmra.mxu0 %v109
    %v261 = vpop.f32.mrf.mxu0
    %v262 = vadd.f32 %v51, %v261
    %v263 = vpop.f32.mrf.mxu0
    %v264 = vadd.f32 %v55, %v263
    %265 = vmatprep.mubr.f32.mxu0 0.0
    %266 = vmatmul.mubr.f32.gmra.mxu0 %v112
    %v267 = vpop.f32.mrf.mxu0
    %v268 = vadd.f32 %v51, %v267
    %v269 = vpop.f32.mrf.mxu0
    %v270 = vadd.f32 %v55, %v269
    %271 = vmatprep.mubr.f32.mxu0 0.0
    %272 = vmatmul.mubr.f32.gmra.mxu0 %v115
    %v273 = vpop.f32.mrf.mxu0
    %v274 = vadd.f32 %v51, %v273
    %v275 = vpop.f32.mrf.mxu0
    %v276 = vadd.f32 %v55, %v275
    %277 = vdwg.mxu0
    %278 = vmatprep.subr.mxu0 0.0
    %279 = vmatpush1.msra.mxu0 0.0
    %280 = vmatprep.subr.mxu0 0.0
    %281 = vmatpush1.msra.mxu0 0.0
    %282 = vmatprep.subr.mxu0 0.0
    %283 = vmatpush1.msra.mxu0 0.0
    %284 = vmatprep.subr.mxu0 0.0
    %285 = vmatpush1.msra.mxu0 0.0
    %286 = vmatprep.subr.mxu0 0.0
    %287 = vmatpush1.msra.mxu0 0.0
    %288 = vmatprep.subr.mxu0 0.0
    %289 = vmatpush1.msra.mxu0 0.0
    %290 = vmatprep.subr.mxu0 0.0
    %291 = vmatpush1.msra.mxu0 0.0
    %292 = vmatprep.subr.mxu0 0.0
    %293 = vmatpush1.msra.mxu0 0.0
    %294 = vmatprep.subr.mxu0 0.0
    %295 = vmatpush1.msra.mxu0 0.0
    %296 = vmatprep.subr.mxu0 0.0
    %297 = vmatpush1.msra.mxu0 0.0
    %298 = vmatprep.subr.mxu0 0.0
    %299 = vmatpush1.msra.mxu0 0.0
    %300 = vmatprep.subr.mxu0 0.0
    %301 = vmatpush1.msra.mxu0 0.0
    %302 = vmatprep.subr.mxu0 0.0
    %303 = vmatpush1.msra.mxu0 0.0
    %304 = vmatprep.subr.mxu0 0.0
    %305 = vmatpush1.msra.mxu0 0.0
    %306 = vmatprep.subr.mxu0 %v45
    %307 = vmatpush1.msra.mxu0 %v44
    %308 = vmatprep.subr.mxu0 %v41
    %309 = vmatpush1.msra.mxu0 %v40
    %310 = vmatprep.subr.mxu0 0.0
    %311 = vmatpush2.msra.mxu0 0.0
    %312 = vmatprep.subr.mxu0 0.0
    %313 = vmatpush2.msra.mxu0 0.0
    %314 = vmatprep.subr.mxu0 0.0
    %315 = vmatpush2.msra.mxu0 0.0
    %316 = vmatprep.subr.mxu0 0.0
    %317 = vmatpush2.msra.mxu0 0.0
    %318 = vmatprep.subr.mxu0 0.0
    %319 = vmatpush2.msra.mxu0 0.0
    %320 = vmatprep.subr.mxu0 0.0
    %321 = vmatpush2.msra.mxu0 0.0
    %322 = vmatprep.subr.mxu0 0.0
    %323 = vmatpush2.msra.mxu0 0.0
    %324 = vmatprep.subr.mxu0 0.0
    %325 = vmatpush2.msra.mxu0 0.0
    %326 = vmatprep.subr.mxu0 0.0
    %327 = vmatpush2.msra.mxu0 0.0
    %328 = vmatprep.subr.mxu0 0.0
    %329 = vmatpush2.msra.mxu0 0.0
    %330 = vmatprep.subr.mxu0 0.0
    %331 = vmatpush2.msra.mxu0 0.0
    %332 = vmatprep.subr.mxu0 0.0
    %333 = vmatpush2.msra.mxu0 0.0
    %334 = vmatprep.subr.mxu0 0.0
    %335 = vmatpush2.msra.mxu0 0.0
    %336 = vmatprep.subr.mxu0 0.0
    %337 = vmatpush2.msra.mxu0 0.0
    %338 = vmatprep.subr.mxu0 0.0
    %339 = vmatpush2.msra.mxu0 0.0
    %340 = vmatprep.subr.mxu0 0.0
    %341 = vmatpush2.msra.mxu0 0.0
    %342 = vmatprep.mubr.f32.mxu0 0.0
    %343 = vmatmul.mubr.f32.gmra.mxu0 %v70
    %v344 = vpop.f32.mrf.mxu0
    %v345 = vadd.f32 %v59, %v344
    %v346 = vpop.f32.mrf.mxu0
    %v347 = vadd.f32 %v63, %v346
    %348 = vmatprep.mubr.f32.mxu0 0.0
    %349 = vmatmul.mubr.f32.gmra.mxu0 %v73
    %v350 = vpop.f32.mrf.mxu0
    %v351 = vadd.f32 %v59, %v350
    %v352 = vpop.f32.mrf.mxu0
    %v353 = vadd.f32 %v63, %v352
    %354 = vmatprep.mubr.f32.mxu0 0.0
    %355 = vmatmul.mubr.f32.gmra.mxu0 %v76
    %v356 = vpop.f32.mrf.mxu0
    %v357 = vadd.f32 %v59, %v356
    %v358 = vpop.f32.mrf.mxu0
    %v359 = vadd.f32 %v63, %v358
    %360 = vmatprep.mubr.f32.mxu0 0.0
    %361 = vmatmul.mubr.f32.gmra.mxu0 %v79
    %v362 = vpop.f32.mrf.mxu0
    %v363 = vadd.f32 %v59, %v362
    %v364 = vpop.f32.mrf.mxu0
    %v365 = vadd.f32 %v63, %v364
    %366 = vmatprep.mubr.f32.mxu0 0.0
    %367 = vmatmul.mubr.f32.gmra.mxu0 %v82
    %v368 = vpop.f32.mrf.mxu0
    %v369 = vadd.f32 %v59, %v368
    %v370 = vpop.f32.mrf.mxu0
    %v371 = vadd.f32 %v63, %v370
    %372 = vmatprep.mubr.f32.mxu0 0.0
    %373 = vmatmul.mubr.f32.gmra.mxu0 %v85
    %v374 = vpop.f32.mrf.mxu0
    %v375 = vadd.f32 %v59, %v374
    %v376 = vpop.f32.mrf.mxu0
    %v377 = vadd.f32 %v63, %v376
    %378 = vmatprep.mubr.f32.mxu0 0.0
    %379 = vmatmul.mubr.f32.gmra.mxu0 %v88
    %v380 = vpop.f32.mrf.mxu0
    %v381 = vadd.f32 %v59, %v380
    %v382 = vpop.f32.mrf.mxu0
    %v383 = vadd.f32 %v63, %v382
    %384 = vmatprep.mubr.f32.mxu0 0.0
    %385 = vmatmul.mubr.f32.gmra.mxu0 %v91
    %v386 = vpop.f32.mrf.mxu0
    %v387 = vadd.f32 %v59, %v386
    %v388 = vpop.f32.mrf.mxu0
    %v389 = vadd.f32 %v63, %v388
    %390 = vmatprep.mubr.f32.mxu0 0.0
    %391 = vmatmul.mubr.f32.gmra.mxu0 %v94
    %v392 = vpop.f32.mrf.mxu0
    %v393 = vadd.f32 %v59, %v392
    %v394 = vpop.f32.mrf.mxu0
    %v395 = vadd.f32 %v63, %v394
    %396 = vmatprep.mubr.f32.mxu0 0.0
    %397 = vmatmul.mubr.f32.gmra.mxu0 %v97
    %v398 = vpop.f32.mrf.mxu0
    %v399 = vadd.f32 %v59, %v398
    %v400 = vpop.f32.mrf.mxu0
    %v401 = vadd.f32 %v63, %v400
    %402 = vmatprep.mubr.f32.mxu0 0.0
    %403 = vmatmul.mubr.f32.gmra.mxu0 %v100
    %v404 = vpop.f32.mrf.mxu0
    %v405 = vadd.f32 %v59, %v404
    %v406 = vpop.f32.mrf.mxu0
    %v407 = vadd.f32 %v63, %v406
    %408 = vmatprep.mubr.f32.mxu0 0.0
    %409 = vmatmul.mubr.f32.gmra.mxu0 %v103
    %v410 = vpop.f32.mrf.mxu0
    %v411 = vadd.f32 %v59, %v410
    %v412 = vpop.f32.mrf.mxu0
    %v413 = vadd.f32 %v63, %v412
    %414 = vmatprep.mubr.f32.mxu0 0.0
    %415 = vmatmul.mubr.f32.gmra.mxu0 %v106
    %v416 = vpop.f32.mrf.mxu0
    %v417 = vadd.f32 %v59, %v416
    %v418 = vpop.f32.mrf.mxu0
    %v419 = vadd.f32 %v63, %v418
    %420 = vmatprep.mubr.f32.mxu0 0.0
    %421 = vmatmul.mubr.f32.gmra.mxu0 %v109
    %v422 = vpop.f32.mrf.mxu0
    %v423 = vadd.f32 %v59, %v422
    %v424 = vpop.f32.mrf.mxu0
    %v425 = vadd.f32 %v63, %v424
    %426 = vmatprep.mubr.f32.mxu0 0.0
    %427 = vmatmul.mubr.f32.gmra.mxu0 %v112
    %v428 = vpop.f32.mrf.mxu0
    %v429 = vadd.f32 %v59, %v428
    %v430 = vpop.f32.mrf.mxu0
    %v431 = vadd.f32 %v63, %v430
    %432 = vmatprep.mubr.f32.mxu0 0.0
    %433 = vmatmul.mubr.f32.gmra.mxu0 %v115
    %v434 = vpop.f32.mrf.mxu0
    %v435 = vadd.f32 %v59, %v434
    %v436 = vpop.f32.mrf.mxu0
    %v437 = vadd.f32 %v63, %v436
    %438 = vdwg.mxu0
    %v439 = vmax.f32 %v184, 0.0
    %v440 = vmax.f32 %v186, 0.0
    %v441 = vmax.f32 %v345, 0.0
    %v442 = vmax.f32 %v347, 0.0
    %v443 = vmax.f32 %v190, 0.0
    %v444 = vmax.f32 %v192, 0.0
    %v445 = vmax.f32 %v351, 0.0
    %v446 = vmax.f32 %v353, 0.0
    %v447 = vmax.f32 %v196, 0.0
    %v448 = vmax.f32 %v198, 0.0
    %v449 = vmax.f32 %v357, 0.0
    %v450 = vmax.f32 %v359, 0.0
    %v451 = vmax.f32 %v202, 0.0
    %v452 = vmax.f32 %v204, 0.0
    %v453 = vmax.f32 %v363, 0.0
    %v454 = vmax.f32 %v365, 0.0
    %v455 = vmax.f32 %v208, 0.0
    %v456 = vmax.f32 %v210, 0.0
    %v457 = vmax.f32 %v369, 0.0
    %v458 = vmax.f32 %v371, 0.0
    %v459 = vmax.f32 %v214, 0.0
    %v460 = vmax.f32 %v216, 0.0
    %v461 = vmax.f32 %v375, 0.0
    %v462 = vmax.f32 %v377, 0.0
    %v463 = vmax.f32 %v220, 0.0
    %v464 = vmax.f32 %v222, 0.0
    %v465 = vmax.f32 %v381, 0.0
    %v466 = vmax.f32 %v383, 0.0
    %v467 = vmax.f32 %v226, 0.0
    %v468 = vmax.f32 %v228, 0.0
    %v469 = vmax.f32 %v387, 0.0
    %v470 = vmax.f32 %v389, 0.0
    %v471 = vmax.f32 %v232, 0.0
    %v472 = vmax.f32 %v234, 0.0
    %v473 = vmax.f32 %v393, 0.0
    %v474 = vmax.f32 %v395, 0.0
    %v475 = vmax.f32 %v238, 0.0
    %v476 = vmax.f32 %v240, 0.0
    %v477 = vmax.f32 %v399, 0.0
    %v478 = vmax.f32 %v401, 0.0
    %v479 = vmax.f32 %v244, 0.0
    %v480 = vmax.f32 %v246, 0.0
    %v481 = vmax.f32 %v405, 0.0
    %v482 = vmax.f32 %v407, 0.0
    %v483 = vmax.f32 %v250, 0.0
    %v484 = vmax.f32 %v252, 0.0
    %v485 = vmax.f32 %v411, 0.0
    %v486 = vmax.f32 %v413, 0.0
    %v487 = vmax.f32 %v256, 0.0
    %v488 = vmax.f32 %v258, 0.0
    %v489 = vmax.f32 %v417, 0.0
    %v490 = vmax.f32 %v419, 0.0
    %v491 = vmax.f32 %v262, 0.0
    %v492 = vmax.f32 %v264, 0.0
    %v493 = vmax.f32 %v423, 0.0
    %v494 = vmax.f32 %v425, 0.0
    %v495 = vmax.f32 %v268, 0.0
    %v496 = vmax.f32 %v270, 0.0
    %v497 = vmax.f32 %v429, 0.0
    %v498 = vmax.f32 %v431, 0.0
    %v499 = vmax.f32 %v274, 0.0
    %v500 = vmax.f32 %v276, 0.0
    %v501 = vmax.f32 %v435, 0.0
    %v502 = vmax.f32 %v437, 0.0
    %v503 = vld [vmem:[%s3] sm:$0xf]
    %v505 = vlaneseq
    %v506 = vshrl.u32 %v505, 7
    %v507 = vsub.s32 0, %v506
    %v508 = vrot.slane %v503, %v507
    %v509 = vlaneseq
    %v510 = vshrl.u32 %v509, 7
    %v511 = vsub.s32 1, %v510
    %v512 = vrot.slane %v503, %v511
    %v513 = vlaneseq
    %v514 = vshrl.u32 %v513, 7
    %v515 = vsub.s32 2, %v514
    %v516 = vrot.slane %v503, %v515
    %v517 = vlaneseq
    %v518 = vshrl.u32 %v517, 7
    %v519 = vsub.s32 3, %v518
    %v520 = vrot.slane %v503, %v519
    %v525 = vmul.f32 %v439, %v508
    %v526 = vmul.f32 %v440, %v512
    %v527 = vmul.f32 %v441, %v516
    %v528 = vmul.f32 %v442, %v520
    %v529 = vmul.f32 %v443, %v508
    %v530 = vmul.f32 %v444, %v512
    %v531 = vmul.f32 %v445, %v516
    %v532 = vmul.f32 %v446, %v520
    %v533 = vmul.f32 %v447, %v508
    %v534 = vmul.f32 %v448, %v512
    %v535 = vmul.f32 %v449, %v516
    %v536 = vmul.f32 %v450, %v520
    %v537 = vmul.f32 %v451, %v508
    %v538 = vmul.f32 %v452, %v512
    %v539 = vmul.f32 %v453, %v516
    %v540 = vmul.f32 %v454, %v520
    %v541 = vmul.f32 %v455, %v508
    %v542 = vmul.f32 %v456, %v512
    %v543 = vmul.f32 %v457, %v516
    %v544 = vmul.f32 %v458, %v520
    %v545 = vmul.f32 %v459, %v508
    %v546 = vmul.f32 %v460, %v512
    %v547 = vmul.f32 %v461, %v516
    %v548 = vmul.f32 %v462, %v520
    %v549 = vmul.f32 %v463, %v508
    %v550 = vmul.f32 %v464, %v512
    %v551 = vmul.f32 %v465, %v516
    %v552 = vmul.f32 %v466, %v520
    %v553 = vmul.f32 %v467, %v508
    %v554 = vmul.f32 %v468, %v512
    %v555 = vmul.f32 %v469, %v516
    %v556 = vmul.f32 %v470, %v520
    %v557 = vmul.f32 %v471, %v508
    %v558 = vmul.f32 %v472, %v512
    %v559 = vmul.f32 %v473, %v516
    %v560 = vmul.f32 %v474, %v520
    %v561 = vmul.f32 %v475, %v508
    %v562 = vmul.f32 %v476, %v512
    %v563 = vmul.f32 %v477, %v516
    %v564 = vmul.f32 %v478, %v520
    %v565 = vmul.f32 %v479, %v508
    %v566 = vmul.f32 %v480, %v512
    %v567 = vmul.f32 %v481, %v516
    %v568 = vmul.f32 %v482, %v520
    %v569 = vmul.f32 %v483, %v508
    %v570 = vmul.f32 %v484, %v512
    %v571 = vmul.f32 %v485, %v516
    %v572 = vmul.f32 %v486, %v520
    %v573 = vmul.f32 %v487, %v508
    %v574 = vmul.f32 %v488, %v512
    %v575 = vmul.f32 %v489, %v516
    %v576 = vmul.f32 %v490, %v520
    %v577 = vmul.f32 %v491, %v508
    %v578 = vmul.f32 %v492, %v512
    %v579 = vmul.f32 %v493, %v516
    %v580 = vmul.f32 %v494, %v520
    %v581 = vmul.f32 %v495, %v508
    %v582 = vmul.f32 %v496, %v512
    %v583 = vmul.f32 %v497, %v516
    %v584 = vmul.f32 %v498, %v520
    %v585 = vmul.f32 %v499, %v508
    %v586 = vmul.f32 %v500, %v512
    %v587 = vmul.f32 %v501, %v516
    %v588 = vmul.f32 %v502, %v520
    %v589 = vadd.f32 %v525, %v526
    %v590 = vadd.f32 %v589, %v527
    %v591 = vadd.f32 %v590, %v528
    %592 = vadd.xlane.f32.xlu0 %v591
    %v593 = vpop.xlane.xlu0 %592
    %v594 = vadd.f32 %v529, %v530
    %v595 = vadd.f32 %v594, %v531
    %v596 = vadd.f32 %v595, %v532
    %597 = vadd.xlane.f32.xlu0 %v596
    %v598 = vpop.xlane.xlu0 %597
    %v599 = vadd.f32 %v533, %v534
    %v600 = vadd.f32 %v599, %v535
    %v601 = vadd.f32 %v600, %v536
    %602 = vadd.xlane.f32.xlu0 %v601
    %v603 = vpop.xlane.xlu0 %602
    %v604 = vadd.f32 %v537, %v538
    %v605 = vadd.f32 %v604, %v539
    %v606 = vadd.f32 %v605, %v540
    %607 = vadd.xlane.f32.xlu0 %v606
    %v608 = vpop.xlane.xlu0 %607
    %v609 = vadd.f32 %v541, %v542
    %v610 = vadd.f32 %v609, %v543
    %v611 = vadd.f32 %v610, %v544
    %612 = vadd.xlane.f32.xlu0 %v611
    %v613 = vpop.xlane.xlu0 %612
    %v614 = vadd.f32 %v545, %v546
    %v615 = vadd.f32 %v614, %v547
    %v616 = vadd.f32 %v615, %v548
    %617 = vadd.xlane.f32.xlu0 %v616
    %v618 = vpop.xlane.xlu0 %617
    %v619 = vadd.f32 %v549, %v550
    %v620 = vadd.f32 %v619, %v551
    %v621 = vadd.f32 %v620, %v552
    %622 = vadd.xlane.f32.xlu0 %v621
    %v623 = vpop.xlane.xlu0 %622
    %v624 = vadd.f32 %v553, %v554
    %v625 = vadd.f32 %v624, %v555
    %v626 = vadd.f32 %v625, %v556
    %627 = vadd.xlane.f32.xlu0 %v626
    %v628 = vpop.xlane.xlu0 %627
    %v629 = vadd.f32 %v557, %v558
    %v630 = vadd.f32 %v629, %v559
    %v631 = vadd.f32 %v630, %v560
    %632 = vadd.xlane.f32.xlu0 %v631
    %v633 = vpop.xlane.xlu0 %632
    %v634 = vadd.f32 %v561, %v562
    %v635 = vadd.f32 %v634, %v563
    %v636 = vadd.f32 %v635, %v564
    %637 = vadd.xlane.f32.xlu0 %v636
    %v638 = vpop.xlane.xlu0 %637
    %v639 = vadd.f32 %v565, %v566
    %v640 = vadd.f32 %v639, %v567
    %v641 = vadd.f32 %v640, %v568
    %642 = vadd.xlane.f32.xlu0 %v641
    %v643 = vpop.xlane.xlu0 %642
    %v644 = vadd.f32 %v569, %v570
    %v645 = vadd.f32 %v644, %v571
    %v646 = vadd.f32 %v645, %v572
    %647 = vadd.xlane.f32.xlu0 %v646
    %v648 = vpop.xlane.xlu0 %647
    %v649 = vadd.f32 %v573, %v574
    %v650 = vadd.f32 %v649, %v575
    %v651 = vadd.f32 %v650, %v576
    %652 = vadd.xlane.f32.xlu0 %v651
    %v653 = vpop.xlane.xlu0 %652
    %v654 = vadd.f32 %v577, %v578
    %v655 = vadd.f32 %v654, %v579
    %v656 = vadd.f32 %v655, %v580
    %657 = vadd.xlane.f32.xlu0 %v656
    %v658 = vpop.xlane.xlu0 %657
    %v659 = vadd.f32 %v581, %v582
    %v660 = vadd.f32 %v659, %v583
    %v661 = vadd.f32 %v660, %v584
    %662 = vadd.xlane.f32.xlu0 %v661
    %v663 = vpop.xlane.xlu0 %662
    %v664 = vadd.f32 %v585, %v586
    %v665 = vadd.f32 %v664, %v587
    %v666 = vadd.f32 %v665, %v588
    %667 = vadd.xlane.f32.xlu0 %v666
    %v668 = vpop.xlane.xlu0 %667
    %s669 = sld [smem:[#allocation2]]
    %v670 = vstv %s669
    %v671 = vadd.f32 %v593, %v670
    %v672 = vadd.f32 %v598, %v670
    %v673 = vadd.f32 %v603, %v670
    %v674 = vadd.f32 %v608, %v670
    %v675 = vadd.f32 %v613, %v670
    %v676 = vadd.f32 %v618, %v670
    %v677 = vadd.f32 %v623, %v670
    %v678 = vadd.f32 %v628, %v670
    %v679 = vadd.f32 %v633, %v670
    %v680 = vadd.f32 %v638, %v670
    %v681 = vadd.f32 %v643, %v670
    %v682 = vadd.f32 %v648, %v670
    %v683 = vadd.f32 %v653, %v670
    %v684 = vadd.f32 %v658, %v670
    %v685 = vadd.f32 %v663, %v670
    %v686 = vadd.f32 %v668, %v670
    %v687 = vtanh.pop %v671
    %v688 = vtanh.pop %v672
    %v689 = vtanh.pop %v673
    %v690 = vtanh.pop %v674
    %v691 = vtanh.pop %v675
    %v692 = vtanh.pop %v676
    %v693 = vtanh.pop %v677
    %v694 = vtanh.pop %v678
    %v695 = vtanh.pop %v679
    %v696 = vtanh.pop %v680
    %v697 = vtanh.pop %v681
    %v698 = vtanh.pop %v682
    %v699 = vtanh.pop %v683
    %v700 = vtanh.pop %v684
    %v701 = vtanh.pop %v685
    %v702 = vtanh.pop %v686
    %v719 = vlaneseq
    %v720 = vand.u32 %v719, 127
    %v721 = vlaneseq
    %v722 = vshrl.u32 %v721, 7
    %v723 = vsub.s32 %v720, %v722
    %v724 = vrot.slane %v687, %v723
    %v725 = vadd.s32 %v720, 4294967288
    %v726 = vlaneseq
    %v727 = vshrl.u32 %v726, 7
    %v728 = vsub.s32 %v725, %v727
    %v729 = vrot.slane %v688, %v728
    %vm730 = vcmask 130112
    %v731 = vsel %vm730, %v729, %v724
    %v732 = vadd.s32 %v720, 4294967280
    %v733 = vlaneseq
    %v734 = vshrl.u32 %v733, 7
    %v735 = vsub.s32 %v732, %v734
    %v736 = vrot.slane %v689, %v735
    %vm737 = vcmask 195712
    %v738 = vsel %vm737, %v736, %v731
    %v739 = vadd.s32 %v720, 4294967272
    %v740 = vlaneseq
    %v741 = vshrl.u32 %v740, 7
    %v742 = vsub.s32 %v739, %v741
    %v743 = vrot.slane %v690, %v742
    %vm744 = vcmask 261312
    %v745 = vsel %vm744, %v743, %v738
    %v746 = vadd.s32 %v720, 4294967264
    %v747 = vlaneseq
    %v748 = vshrl.u32 %v747, 7
    %v749 = vsub.s32 %v746, %v748
    %v750 = vrot.slane %v691, %v749
    %vm751 = vcmask 326912
    %v752 = vsel %vm751, %v750, %v745
    %v753 = vadd.s32 %v720, 4294967256
    %v754 = vlaneseq
    %v755 = vshrl.u32 %v754, 7
    %v756 = vsub.s32 %v753, %v755
    %v757 = vrot.slane %v692, %v756
    %vm758 = vcmask 392512
    %v759 = vsel %vm758, %v757, %v752
    %v760 = vadd.s32 %v720, 4294967248
    %v761 = vlaneseq
    %v762 = vshrl.u32 %v761, 7
    %v763 = vsub.s32 %v760, %v762
    %v764 = vrot.slane %v693, %v763
    %vm765 = vcmask 458112
    %v766 = vsel %vm765, %v764, %v759
    %v767 = vadd.s32 %v720, 4294967240
    %v768 = vlaneseq
    %v769 = vshrl.u32 %v768, 7
    %v770 = vsub.s32 %v767, %v769
    %v771 = vrot.slane %v694, %v770
    %vm772 = vcmask 523712
    %v773 = vsel %vm772, %v771, %v766
    %v774 = vadd.s32 %v720, 4294967232
    %v775 = vlaneseq
    %v776 = vshrl.u32 %v775, 7
    %v777 = vsub.s32 %v774, %v776
    %v778 = vrot.slane %v695, %v777
    %vm779 = vcmask 589312
    %v780 = vsel %vm779, %v778, %v773
    %v781 = vadd.s32 %v720, 4294967224
    %v782 = vlaneseq
    %v783 = vshrl.u32 %v782, 7
    %v784 = vsub.s32 %v781, %v783
    %v785 = vrot.slane %v696, %v784
    %vm786 = vcmask 654912
    %v787 = vsel %vm786, %v785, %v780
    %v788 = vadd.s32 %v720, 4294967216
    %v789 = vlaneseq
    %v790 = vshrl.u32 %v789, 7
    %v791 = vsub.s32 %v788, %v790
    %v792 = vrot.slane %v697, %v791
    %vm793 = vcmask 720512
    %v794 = vsel %vm793, %v792, %v787
    %v795 = vadd.s32 %v720, 4294967208
    %v796 = vlaneseq
    %v797 = vshrl.u32 %v796, 7
    %v798 = vsub.s32 %v795, %v797
    %v799 = vrot.slane %v698, %v798
    %vm800 = vcmask 786112
    %v801 = vsel %vm800, %v799, %v794
    %v802 = vadd.s32 %v720, 4294967200
    %v803 = vlaneseq
    %v804 = vshrl.u32 %v803, 7
    %v805 = vsub.s32 %v802, %v804
    %v806 = vrot.slane %v699, %v805
    %vm807 = vcmask 851712
    %v808 = vsel %vm807, %v806, %v801
    %v809 = vadd.s32 %v720, 4294967192
    %v810 = vlaneseq
    %v811 = vshrl.u32 %v810, 7
    %v812 = vsub.s32 %v809, %v811
    %v813 = vrot.slane %v700, %v812
    %vm814 = vcmask 917312
    %v815 = vsel %vm814, %v813, %v808
    %v816 = vadd.s32 %v720, 4294967184
    %v817 = vlaneseq
    %v818 = vshrl.u32 %v817, 7
    %v819 = vsub.s32 %v816, %v818
    %v820 = vrot.slane %v701, %v819
    %vm821 = vcmask 982912
    %v822 = vsel %vm821, %v820, %v815
    %v823 = vadd.s32 %v720, 4294967176
    %v824 = vlaneseq
    %v825 = vshrl.u32 %v824, 7
    %v826 = vsub.s32 %v823, %v825
    %v827 = vrot.slane %v702, %v826
    %vm828 = vcmask 1048512
    %v829 = vsel %vm828, %v827, %v822
    %831 = vst [vmem:[#allocation3] sm:$0x1] %v829
    // Predicated region
    $region22: #{tpu_custom_call.1} parent=1 // pred_check
      _
    $region23: #{tpu_custom_call.1} parent=1 // pred_check_branch
      %833 = sbr.rel (0) target = $region25
    $region24: #{tpu_custom_call.1} parent=1 // pred_region
      %s835 = ssub.s32 16, 16
      %836 = vsyncadd [#allocation4], %s835
      %s838 = sshll.u32 [#allocation3], 4
      %s839 = int_to_ptr.vmem [resolvable:$true] %s838
      %841 = dma.vmem_to_hbm [thread:$0]  %s839, 16, %s5, [#allocation4]
    $region25: #{tpu_custom_call.1} parent=1 // pred_fallthru
      _
    // Predicated region
    $region26: #{tpu_custom_call.1} parent=1 // pred_check
      _
    $region27: #{tpu_custom_call.1} parent=1 // pred_check_branch
      %843 = sbr.rel (0) target = $region29
    $region28: #{tpu_custom_call.1} parent=1 // pred_region
      %844 = dma.done [#allocation4], 16
    $region29: #{tpu_custom_call.1} parent=1 // pred_fallthru
      _
    %845 = vsyncpa [#allocation4], 1

</llo_original>
